<compile_context>
chip_gen: v6e
topology: v6e:2x2x1
jax: 0.10.0
libtpu: 0.0.40
codegen_flags: <defaults>
</compile_context>

<pallas_src>
import jax
import jax.numpy as jnp
from jax.experimental import pallas as pl
from jax.experimental.pallas import tpu as pltpu


def _round_up(v, m):
    return ((v + m - 1) // m) * m


def _linear_kernel(x_ref, w_ref, b_ref, o_ref):
    """Computes one (tm, tn) output tile; grid axis 2 is the H reduction.

    x_ref: (tm, tk) compute dtype    w_ref: (tk, tn) compute dtype
    b_ref: (1, tn)  float32          o_ref: (tm, tn) float32

    The output block index does not depend on k, so o_ref stays resident in
    VMEM across the whole reduction and doubles as the f32 accumulator
    (no scratch buffer, no finalize copy).
    """
    k = pl.program_id(2)

    @pl.when(k == 0)
    def _():
        # Initialize the resident output tile with the bias once per (i, j).
        o_ref[...] = jnp.broadcast_to(b_ref[...], o_ref.shape).astype(o_ref.dtype)

    o_ref[...] += jnp.dot(
        x_ref[...], w_ref[...], preferred_element_type=jnp.float32
    )


def prepare_classifer_params(weight, bias, *, tn=512, tk=1024,
                             compute_dtype=jnp.float32):
    """One-time parameter layout, hoisted out of the forward path.

    weight: (O, H) PyTorch Linear layout -> stored as padded (Hp, Op)
    bias:   (O,)                         -> stored as padded (1, Op) f32
    """
    O, H = weight.shape
    tn = min(tn, _round_up(O, 128))     # lane-dense output (>= 128 wide)
    tk = min(tk, _round_up(H, 128))
    Hp = _round_up(H, tk)
    Op = _round_up(O, tn)
    # Zero-padding along H contributes 0 to the dot; padded output columns are
    # sliced off in the forward wrapper.
    w_p = jnp.pad(weight.T, ((0, Hp - H), (0, Op - O))).astype(compute_dtype)
    b_p = jnp.pad(bias, (0, Op - O)).reshape(1, Op).astype(jnp.float32)
    meta = dict(H=H, O=O, Hp=Hp, Op=Op, tn=tn, tk=tk,
                compute_dtype=jnp.dtype(compute_dtype))
    return w_p, b_p, meta


def classifer_forward(x, w_p, b_p, meta, *, tm=256, force_pallas=False):
    """Pallas equivalent of `Classifer.forward` using pre-laid-out params."""
    B, H = x.shape
    assert H == meta["H"], "hidden dim mismatch"
    O, Hp, Op = meta["O"], meta["Hp"], meta["Op"]
    tn, tk = meta["tn"], meta["tk"]
    compute_dtype = meta["compute_dtype"]

    tm = min(tm, _round_up(B, 8))
    Bp = _round_up(B, tm)
    gm, gn, gk = Bp // tm, Op // tn, Hp // tk

    # Single-tile problems are pure launch/DMA/padding overhead in Pallas;
    # plain XLA fusion is faster on all generations.
    if (not force_pallas) and gm * gn * gk == 1:
        y = jnp.dot(x.astype(compute_dtype), w_p[:H, :O],
                    preferred_element_type=jnp.float32)
        return y + b_p[0, :O]

    x_p = jnp.pad(x, ((0, Bp - B), (0, Hp - H))).astype(compute_dtype)

    # HBM-traffic-aware grid ordering: when the reduction is a single k step,
    # the operand whose block index is constant across the inner grid axis is
    # fetched only once (Pallas skips the repeat DMA).  Pick the order that
    # minimizes total HBM bytes.
    itemsize = compute_dtype.itemsize
    x_bytes = Bp * Hp * itemsize
    w_bytes = Hp * Op * itemsize
    traffic_ij = (x_bytes if gk == 1 else x_bytes * gn) + w_bytes * gm
    traffic_ji = (w_bytes if gk == 1 else w_bytes * gm) + x_bytes * gn
    if traffic_ij <= traffic_ji:
        grid = (gm, gn, gk)                      # batch outer, out-features inner
        x_map = lambda i, j, k: (i, k)
        w_map = lambda i, j, k: (k, j)
        b_map = lambda i, j, k: (0, j)
        o_map = lambda i, j, k: (i, j)
    else:
        grid = (gn, gm, gk)                      # out-features outer, batch inner
        x_map = lambda j, i, k: (i, k)
        w_map = lambda j, i, k: (k, j)
        b_map = lambda j, i, k: (0, j)
        o_map = lambda j, i, k: (i, j)

    # Scoped-VMEM budget: double-buffered x/w tiles + double-buffered f32
    # output tile + bias, with 2x headroom, capped well under v7x's 64 MiB.
    vmem_est = (2 * (tm * tk + tk * tn) * itemsize
                + 2 * tm * tn * 4
                + 2 * tn * 4)
    vmem_limit = int(min(max(2 * vmem_est, 32 * 1024 * 1024),
                         48 * 1024 * 1024))

    out_p = pl.pallas_call(
        _linear_kernel,
        out_shape=jax.ShapeDtypeStruct((Bp, Op), jnp.float32),
        grid_spec=pltpu.PrefetchScalarGridSpec(
            num_scalar_prefetch=0,
            grid=grid,
            in_specs=[
                pl.BlockSpec((tm, tk), x_map),
                pl.BlockSpec((tk, tn), w_map),
                pl.BlockSpec((1, tn), b_map),
            ],
            out_specs=pl.BlockSpec((tm, tn), o_map),
        ),
        compiler_params=pltpu.CompilerParams(
            # Both non-reduction axes parallel -> megacore sharding on v7x.
            dimension_semantics=("parallel", "parallel", "arbitrary"),
            vmem_limit_bytes=vmem_limit,
        ),
    )(x_p, w_p, b_p)

    return out_p[:B, :O]


def classifer_apply(x, weight, bias, **kwargs):
    """Convenience one-shot path (prep + forward)."""
    w_p, b_p, meta = prepare_classifer_params(weight, bias)
    return classifer_forward(x, w_p, b_p, meta, **kwargs)


def _reference(x, weight, bias):
    return x @ weight.T + bias[None, :]


if __name__ == "__main__":
    # --- Test 1: the literal module shape (hidden_dim=100, small head) ------
    hidden_dim = 100
    op_dim = 8
    batch = 4

    key = jax.random.PRNGKey(0)
    kx, kw, kb, kx2, kw2, kb2 = jax.random.split(key, 6)

    bound = 1.0 / (hidden_dim ** 0.5)
    weight = jax.random.uniform(kw, (op_dim, hidden_dim), jnp.float32, -bound, bound)
    bias = jax.random.uniform(kb, (op_dim,), jnp.float32, -bound, bound)
    x = jax.random.normal(kx, (batch, hidden_dim), jnp.float32)

    # One-time parameter layout (hoisted out of the forward path).
    w_p, b_p, meta = prepare_classifer_params(weight, bias)

    ref = _reference(x, weight, bias)

    # Forced Pallas path (single-tile grid) for correctness.
    out = classifer_forward(x, w_p, b_p, meta, force_pallas=True)
    out = jax.block_until_ready(out)
    assert out.shape == (batch, op_dim)
    assert jnp.allclose(out, ref, atol=1e-5, rtol=1e-5), "Pallas path mismatch"

    # Auto path (takes the tiny-shape XLA fallback here).
    out_auto = jax.block_until_ready(classifer_forward(x, w_p, b_p, meta))
    assert jnp.allclose(out_auto, ref, atol=1e-5, rtol=1e-5), "fallback mismatch"

    # --- Test 2: multi-tile grid (exercises k accumulation + both parallel
    #     axes + grid-order selection) -------------------------------------
    B2, H2, O2 = 384, 640, 384
    bound2 = 1.0 / (H2 ** 0.5)
    weight2 = jax.random.uniform(kw2, (O2, H2), jnp.float32, -bound2, bound2)
    bias2 = jax.random.uniform(kb2, (O2,), jnp.float32, -bound2, bound2)
    x2 = jax.random.normal(kx2, (B2, H2), jnp.float32)

    w2_p, b2_p, meta2 = prepare_classifer_params(weight2, bias2, tn=256, tk=512)
    out2 = classifer_forward(x2, w2_p, b2_p, meta2, tm=256, force_pallas=True)
    out2 = jax.block_until_ready(out2)
    ref2 = _reference(x2, weight2, bias2)
    assert out2.shape == (B2, O2)
    assert jnp.allclose(out2, ref2, atol=2e-4, rtol=2e-4), "tiled path mismatch"

    print("KERNEL_OK")
</pallas_src>

<mosaic_0001>
module attributes {stable_mosaic.version = 11 : i64} {
  func.func @_linear_kernel(%arg0: i32, %arg1: i32, %arg2: i32, %arg3: memref<8x128xf32, #tpu.memory_space<vmem>>, %arg4: memref<128x128xf32, #tpu.memory_space<vmem>>, %arg5: memref<1x128xf32, #tpu.memory_space<vmem>>, %arg6: memref<8x128xf32, #tpu.memory_space<vmem>>) attributes {dimension_semantics = [#tpu.dimension_semantics<parallel>, #tpu.dimension_semantics<parallel>, #tpu.dimension_semantics<arbitrary>], iteration_bounds = array<i64: 1, 1, 1>, scalar_prefetch = 0 : i64, scratch_operands = 0 : i64, tpu.core_type = #tpu.core_type<tc>, window_params = [{transform_indices = @transform_0, window_bounds = array<i64: 8, 128>}, {transform_indices = @transform_1, window_bounds = array<i64: 128, 128>}, {transform_indices = @transform_2, window_bounds = array<i64: 1, 128>}, {transform_indices = @transform_3, window_bounds = array<i64: 8, 128>}]} {
    %c0_i32 = arith.constant 0 : i32
    %0 = arith.cmpi eq, %arg2, %c0_i32 : i32
    %1 = arith.extui %0 : i1 to i32
    %c0_i32_0 = arith.constant 0 : i32
    %2 = arith.cmpi ne, %1, %c0_i32_0 : i32
    scf.if %2 {
      %c0_8 = arith.constant 0 : index
      %c0_9 = arith.constant 0 : index
      %9 = vector.load %arg5[%c0_8, %c0_9] : memref<1x128xf32, #tpu.memory_space<vmem>>, vector<1x128xf32>
      %10 = vector.shape_cast %9 : vector<1x128xf32> to vector<1x128xf32>
      %11 = vector.broadcast %10 : vector<1x128xf32> to vector<8x128xf32>
      %c0_10 = arith.constant 0 : index
      %c0_11 = arith.constant 0 : index
      %12 = vector.load %arg6[%c0_10, %c0_11] : memref<8x128xf32, #tpu.memory_space<vmem>>, vector<8x128xf32>
      tpu.vector_store %arg6[%c0_10, %c0_11], %11 {strides = array<i32>} : memref<8x128xf32, #tpu.memory_space<vmem>>, vector<8x128xf32>,
    } else {
    }
    %c0 = arith.constant 0 : index
    %c0_1 = arith.constant 0 : index
    %3 = vector.load %arg6[%c0, %c0_1] : memref<8x128xf32, #tpu.memory_space<vmem>>, vector<8x128xf32>
    %c0_2 = arith.constant 0 : index
    %c0_3 = arith.constant 0 : index
    %4 = vector.load %arg3[%c0_2, %c0_3] : memref<8x128xf32, #tpu.memory_space<vmem>>, vector<8x128xf32>
    %c0_4 = arith.constant 0 : index
    %c0_5 = arith.constant 0 : index
    %5 = vector.load %arg4[%c0_4, %c0_5] : memref<128x128xf32, #tpu.memory_space<vmem>>, vector<128x128xf32>
    %cst = arith.constant dense<0.000000e+00> : vector<8x128xf32>
    %6 = tpu.matmul %4, %5, %cst {dimension_numbers = #tpu.dot_dimension_numbers<[1], [0], [0], [1], [0, 0, 1, 1], [], []>} : vector<8x128xf32>, vector<128x128xf32>, vector<8x128xf32> -> vector<8x128xf32>
    %7 = arith.addf %3, %6 : vector<8x128xf32>
    %c0_6 = arith.constant 0 : index
    %c0_7 = arith.constant 0 : index
    %8 = vector.load %arg6[%c0_6, %c0_7] : memref<8x128xf32, #tpu.memory_space<vmem>>, vector<8x128xf32>
    tpu.vector_store %arg6[%c0_6, %c0_7], %7 {strides = array<i32>} : memref<8x128xf32, #tpu.memory_space<vmem>>, vector<8x128xf32>,
    return
  }
  func.func @transform_0(%arg0: i32, %arg1: i32, %arg2: i32) -> (i32, i32) {
    %c0_i32 = arith.constant 0 : i32
    return %arg0, %arg2 : i32, i32
  }
  func.func @transform_1(%arg0: i32, %arg1: i32, %arg2: i32) -> (i32, i32) {
    %c0_i32 = arith.constant 0 : i32
    return %arg2, %arg1 : i32, i32
  }
  func.func @transform_2(%arg0: i32, %arg1: i32, %arg2: i32) -> (i32, i32) {
    %c0_i32 = arith.constant 0 : i32
    %c0_i32_0 = arith.constant 0 : i32
    return %c0_i32, %arg1 : i32, i32
  }
  func.func @transform_3(%arg0: i32, %arg1: i32, %arg2: i32) -> (i32, i32) {
    %c0_i32 = arith.constant 0 : i32
    return %arg0, %arg1 : i32, i32
  }
}

</mosaic_0001>

<llo_original>
// kernel: tpu_custom_call.1
$region0: #{tpu_custom_call.1}
  #allocation0 [shape = 'u32[]', space=smem, size = 0x4, offset = 0x4, fixed_abs, tag = 'smem constant byte address 0x4 - core index']
  #allocation1 [shape = 'u32[144,128]{1,0:T(1,128)}', space=vmem, size = 0x12000, scoped, tag = 'internal scratch']
  %s0 = inlined_call_operand.hbm [shape: f32[8,128], index: 0, kind: input, shape index: {}]
  %s1 = inlined_call_operand.hbm [shape: f32[128,128], index: 1, kind: input, shape index: {}]
  %s2 = inlined_call_operand.vmem [shape: f32[1,128], index: 2, kind: input, shape index: {}]
  %s3 = inlined_call_operand.hbm [shape: f32[8,128], index: 3, kind: output, shape index: {}]
  %s4 = sld [smem:[#allocation0]]
  $region34: #{tpu_custom_call.1} parent=0
    _
  %s6 = ssub.s32 1, %s4
  %s7 = scalar_select 0, %s6, %s4
  $region1: #{tpu_custom_call.1} parent=0
    #allocation2 [shape = 'u8[4096]{0}', space=vmem, size = 0x1000, scoped, tag = 'input window, operand 0, single buffered']
    #allocation3 [shape = 's32[1]{0}', space=sflag, size = 0x4, scoped, tag = 'scoped memory for tpu_custom_call.1']
    #allocation4 [shape = 's32[1]{0}', space=sflag, size = 0x4, scoped, tag = 'scoped memory for tpu_custom_call.1']
    #allocation5 [shape = 'u8[65536]{0}', space=vmem, size = 0x10000, scoped, tag = 'input window, operand 1, single buffered']
    #allocation6 [shape = 's32[1]{0}', space=sflag, size = 0x4, scoped, tag = 'scoped memory for tpu_custom_call.1']
    #allocation7 [shape = 'u8[4096]{0}', space=vmem, size = 0x1000, scoped, tag = 'output window, operand 0, single buffered']
    %8 = vsyncpa [#allocation3], 0
    %9 = vsyncpa [#allocation6], 0
    %10 = vsyncpa [#allocation4], 0
    // Predicated region
    $region2: #{tpu_custom_call.1} parent=1 // pred_check
      _
    $region3: #{tpu_custom_call.1} parent=1 // pred_check_branch
      %12 = sbr.rel (0) target = $region5
    $region4: #{tpu_custom_call.1} parent=1 // pred_region
      %s14 = ssub.s32 128, 128
      %15 = vsyncadd [#allocation3], %s14
      %s17 = sshll.u32 [#allocation2], 4
      %s18 = int_to_ptr.vmem [resolvable:$true] %s17
      %20 = dma.hbm_to_vmem [thread:$0]  %s0, 128, %s18, [#allocation3]
    $region5: #{tpu_custom_call.1} parent=1 // pred_fallthru
      _
    // Predicated region
    $region6: #{tpu_custom_call.1} parent=1 // pred_check
      _
    $region7: #{tpu_custom_call.1} parent=1 // pred_check_branch
      %22 = sbr.rel (0) target = $region9
    $region8: #{tpu_custom_call.1} parent=1 // pred_region
      %s24 = ssub.s32 2048, 2048
      %25 = vsyncadd [#allocation6], %s24
      %s26 = sshll.u32 [#allocation5], 4
      %s27 = int_to_ptr.vmem [resolvable:$true] %s26
      %32 = dma.hbm_to_vmem [thread:$0]  %s1, 2048, %s27, [#allocation6], 128, 128, 8
    $region9: #{tpu_custom_call.1} parent=1 // pred_fallthru
      _
    // Predicated region
    $region10: #{tpu_custom_call.1} parent=1 // pred_check
      _
    $region11: #{tpu_custom_call.1} parent=1 // pred_check_branch
      %34 = sbr.rel (0) target = $region13
    $region12: #{tpu_custom_call.1} parent=1 // pred_region
      _
    $region13: #{tpu_custom_call.1} parent=1 // pred_fallthru
      _
    // Predicated region
    $region14: #{tpu_custom_call.1} parent=1 // pred_check
      _
    $region15: #{tpu_custom_call.1} parent=1 // pred_check_branch
      %36 = sbr.rel (0) target = $region17
    $region16: #{tpu_custom_call.1} parent=1 // pred_region
      %37 = dma.done [#allocation3], 128
    $region17: #{tpu_custom_call.1} parent=1 // pred_fallthru
      _
    // Predicated region
    $region18: #{tpu_custom_call.1} parent=1 // pred_check
      _
    $region19: #{tpu_custom_call.1} parent=1 // pred_check_branch
      %39 = sbr.rel (0) target = $region21
    $region20: #{tpu_custom_call.1} parent=1 // pred_region
      %40 = dma.done [#allocation6], 2048
    $region21: #{tpu_custom_call.1} parent=1 // pred_fallthru
      _
    %p41 = scmp.eq.s32.totalorder 0, 0
    // Predicated region
    $region22: #{tpu_custom_call.1} parent=1 // pred_check
      %p42 = pneg %p41
    $region23: #{tpu_custom_call.1} parent=1 // pred_check_branch
      %44 = sbr.rel (%p42) target = $region25
    $region24: #{tpu_custom_call.1} parent=1 // pred_region
      %v45 = vld [vmem:[%s2] sm:$0x1]
      %v47 = vlaneseq
      %v48 = vshrl.u32 %v47, 7
      %v49 = vsub.s32 0, %v48
      %v50 = vrot.slane %v45, %v49
      %52 = vst [vmem:[#allocation7] sm:$0xff] %v50
    $region25: #{tpu_custom_call.1} parent=1 // pred_fallthru
      _
    %v53 = vld [vmem:[#allocation7] sm:$0xff]
    %v54 = vld [vmem:[#allocation2] sm:$0xff]
    %v55 = vld [vmem:[#allocation5] sm:$0xff]
    %v56 = vld [vmem:[#allocation5 + $0x8] sm:$0xff]
    %v57 = vld [vmem:[#allocation5 + $0x10] sm:$0xff]
    %v58 = vld [vmem:[#allocation5 + $0x18] sm:$0xff]
    %v59 = vld [vmem:[#allocation5 + $0x20] sm:$0xff]
    %v60 = vld [vmem:[#allocation5 + $0x28] sm:$0xff]
    %v61 = vld [vmem:[#allocation5 + $0x30] sm:$0xff]
    %v62 = vld [vmem:[#allocation5 + $0x38] sm:$0xff]
    %v63 = vld [vmem:[#allocation5 + $0x40] sm:$0xff]
    %v64 = vld [vmem:[#allocation5 + $0x48] sm:$0xff]
    %v65 = vld [vmem:[#allocation5 + $0x50] sm:$0xff]
    %v66 = vld [vmem:[#allocation5 + $0x58] sm:$0xff]
    %v67 = vld [vmem:[#allocation5 + $0x60] sm:$0xff]
    %v68 = vld [vmem:[#allocation5 + $0x68] sm:$0xff]
    %v69 = vld [vmem:[#allocation5 + $0x70] sm:$0xff]
    %v70 = vld [vmem:[#allocation5 + $0x78] sm:$0xff]
    %71 = vmatprep.subr.mxu0 0.0
    %72 = vmatpush1.msra.mxu0 %v70
    %73 = vmatprep.subr.mxu0 0.0
    %74 = vmatpush1.msra.mxu0 %v69
    %75 = vmatprep.subr.mxu0 0.0
    %76 = vmatpush1.msra.mxu0 %v68
    %77 = vmatprep.subr.mxu0 0.0
    %78 = vmatpush1.msra.mxu0 %v67
    %79 = vmatprep.subr.mxu0 0.0
    %80 = vmatpush1.msra.mxu0 %v66
    %81 = vmatprep.subr.mxu0 0.0
    %82 = vmatpush1.msra.mxu0 %v65
    %83 = vmatprep.subr.mxu0 0.0
    %84 = vmatpush1.msra.mxu0 %v64
    %85 = vmatprep.subr.mxu0 0.0
    %86 = vmatpush1.msra.mxu0 %v63
    %87 = vmatprep.subr.mxu0 0.0
    %88 = vmatpush1.msra.mxu0 %v62
    %89 = vmatprep.subr.mxu0 0.0
    %90 = vmatpush1.msra.mxu0 %v61
    %91 = vmatprep.subr.mxu0 0.0
    %92 = vmatpush1.msra.mxu0 %v60
    %93 = vmatprep.subr.mxu0 0.0
    %94 = vmatpush1.msra.mxu0 %v59
    %95 = vmatprep.subr.mxu0 0.0
    %96 = vmatpush1.msra.mxu0 %v58
    %97 = vmatprep.subr.mxu0 0.0
    %98 = vmatpush1.msra.mxu0 %v57
    %99 = vmatprep.subr.mxu0 0.0
    %100 = vmatpush1.msra.mxu0 %v56
    %101 = vmatprep.subr.mxu0 0.0
    %102 = vmatpush1.msra.mxu0 %v55
    %103 = vmatprep.subr.mxu0 0.0
    %104 = vmatpush2.msra.mxu0 0.0
    %105 = vmatprep.subr.mxu0 0.0
    %106 = vmatpush2.msra.mxu0 0.0
    %107 = vmatprep.subr.mxu0 0.0
    %108 = vmatpush2.msra.mxu0 0.0
    %109 = vmatprep.subr.mxu0 0.0
    %110 = vmatpush2.msra.mxu0 0.0
    %111 = vmatprep.subr.mxu0 0.0
    %112 = vmatpush2.msra.mxu0 0.0
    %113 = vmatprep.subr.mxu0 0.0
    %114 = vmatpush2.msra.mxu0 0.0
    %115 = vmatprep.subr.mxu0 0.0
    %116 = vmatpush2.msra.mxu0 0.0
    %117 = vmatprep.subr.mxu0 0.0
    %118 = vmatpush2.msra.mxu0 0.0
    %119 = vmatprep.subr.mxu0 0.0
    %120 = vmatpush2.msra.mxu0 0.0
    %121 = vmatprep.subr.mxu0 0.0
    %122 = vmatpush2.msra.mxu0 0.0
    %123 = vmatprep.subr.mxu0 0.0
    %124 = vmatpush2.msra.mxu0 0.0
    %125 = vmatprep.subr.mxu0 0.0
    %126 = vmatpush2.msra.mxu0 0.0
    %127 = vmatprep.subr.mxu0 0.0
    %128 = vmatpush2.msra.mxu0 0.0
    %129 = vmatprep.subr.mxu0 0.0
    %130 = vmatpush2.msra.mxu0 0.0
    %131 = vmatprep.subr.mxu0 0.0
    %132 = vmatpush2.msra.mxu0 0.0
    %133 = vmatprep.subr.mxu0 0.0
    %134 = vmatpush2.msra.mxu0 0.0
    %135 = vmatprep.mubr.f32.mxu0 0.0
    %136 = vmatmul.mubr.f32.gmra.mxu0 %v54
    %v137 = vpop.f32.mrf.mxu0
    %v138 = vadd.f32 0.0, %v137
    %v139 = vpop.f32.mrf.mxu0
    %140 = vdwg.mxu0
    %v141 = vadd.f32 %v53, %v138
    %142 = vst [vmem:[#allocation7] sm:$0xff] %v141
    // Predicated region
    $region26: #{tpu_custom_call.1} parent=1 // pred_check
      _
    $region27: #{tpu_custom_call.1} parent=1 // pred_check_branch
      %144 = sbr.rel (0) target = $region29
    $region28: #{tpu_custom_call.1} parent=1 // pred_region
      %s146 = ssub.s32 128, 128
      %147 = vsyncadd [#allocation4], %s146
      %s149 = sshll.u32 [#allocation7], 4
      %s150 = int_to_ptr.vmem [resolvable:$true] %s149
      %152 = dma.vmem_to_hbm [thread:$0]  %s150, 128, %s3, [#allocation4]
    $region29: #{tpu_custom_call.1} parent=1 // pred_fallthru
      _
    // Predicated region
    $region30: #{tpu_custom_call.1} parent=1 // pred_check
      _
    $region31: #{tpu_custom_call.1} parent=1 // pred_check_branch
      %154 = sbr.rel (0) target = $region33
    $region32: #{tpu_custom_call.1} parent=1 // pred_region
      %155 = dma.done [#allocation4], 128
    $region33: #{tpu_custom_call.1} parent=1 // pred_fallthru
      _
    %156 = vsyncpa [#allocation3], 1
    %157 = vsyncpa [#allocation6], 1
    %158 = vsyncpa [#allocation4], 1

</llo_original>
